<compile_context>
chip_gen: v6e
topology: v6e:2x2x1
jax: 0.10.0
libtpu: 0.0.40
codegen_flags: <defaults>
</compile_context>

<pallas_src>
import functools

import jax
import jax.numpy as jnp
from jax import lax
from jax.experimental import pallas as pl
from jax.experimental.pallas import tpu as pltpu


def _focal_kernel(x_ref, y_ref, alpha_ref, loss_ref, cnt_ref, *, gamma, ignore_index):
    si = pl.program_id(1)

    @pl.when(si == 0)
    def _():
        loss_ref[...] = jnp.zeros_like(loss_ref)
        cnt_ref[...] = jnp.zeros_like(cnt_ref)

    x = x_ref[0].astype(jnp.float32)         # (C, TH, 128)
    y = y_ref[0]                             # (TH, 128) int32
    C, TH, _ = x.shape

    # Numerically stable log_softmax over the class (leading slab) axis:
    # every reduction below is C-1 full-vreg VPU ops per (TH,128) slab.
    m = jnp.max(x, axis=0)                   # (TH, 128)
    z = x - m[None, :, :]                    # (C, TH, 128)
    e = jnp.exp(z)
    lse = jnp.log(jnp.sum(e, axis=0))        # (TH, 128)

    # One-hot pick of the label class (ignore_index never matches -> zero row).
    cls = lax.broadcasted_iota(jnp.int32, (C, 128), 0)[:, None, :]   # (C, 1, 128)
    onehot = (cls == y[None, :, :]).astype(jnp.float32)              # (C, TH, 128)

    log_pt = jnp.sum(z * onehot, axis=0) - lse                       # (TH, 128)
    alpha = alpha_ref[...].astype(jnp.float32)                       # (C, 128)
    alpha_y = jnp.sum(alpha[:, None, :] * onehot, axis=0)            # (TH, 128)

    ce = -alpha_y * log_pt                   # NLLLoss(weight=alpha, reduction='none')
    pt = jnp.exp(log_pt)
    one_m_pt = 1.0 - pt

    if gamma == 0.0:
        loss = ce
    elif float(gamma).is_integer():
        loss = lax.integer_pow(one_m_pt, int(gamma)) * ce            # VPU multiplies
    else:
        loss = (one_m_pt ** gamma) * ce                              # EUP fallback

    valid = (y != ignore_index).astype(jnp.float32)                  # (TH, 128)
    loss = loss * valid

    # Accumulate lane-dense (8,128) partials: cross-vreg VPU adds only.
    loss_ref[...] += jnp.sum(loss.reshape(TH // 8, 8, 128), axis=0)[None]
    cnt_ref[...] += jnp.sum(valid.reshape(TH // 8, 8, 128), axis=0)[None]


def focal_loss(x, y, alpha=None, *, gamma=2.0, ignore_index=-100, reduction="mean"):
    """x: (B, C, d1, ..., dK) or (N, C) logits; y: matching integer labels."""
    if reduction not in ("mean", "sum"):
        # TODO(synk): reduction='none' needs a full per-element output path.
        raise NotImplementedError("only 'mean' and 'sum' reductions are implemented")

    if x.ndim > 2:
        B, C = int(x.shape[0]), int(x.shape[1])
        S = 1
        for d in x.shape[2:]:
            S *= int(d)
        x3 = x.reshape(B, C, S)              # contiguous reshape: no transpose
        y2 = y.reshape(B, S)
    else:
        N, C = int(x.shape[0]), int(x.shape[1])
        B, S = 1, N
        x3 = x.T[None]                       # only the no-spatial-dims case transposes
        y2 = y.reshape(1, N)

    if alpha is None:
        alpha = jnp.ones((C,), jnp.float32)

    # Spatial tile: multiple of a full vreg-row quantum (8x128 f32 / 16x128 bf16),
    # capped so the f32 class-slab working set stays ~2 MiB per grid step.
    quantum = 1024 if jnp.dtype(x.dtype).itemsize >= 4 else 2048
    budget_elems = (2 * 1024 * 1024) // (4 * C)
    ts = max(quantum, (budget_elems // quantum) * quantum)
    s_q = pl.cdiv(S, quantum) * quantum
    ts = min(ts, s_q)
    s_pad = pl.cdiv(s_q, ts) * ts

    if s_pad != S:
        x3 = jnp.pad(x3, ((0, 0), (0, 0), (0, s_pad - S)))
        y2 = jnp.pad(y2, ((0, 0), (0, s_pad - S)), constant_values=ignore_index)

    th = ts // 128
    x4 = x3.reshape(B, C, s_pad // 128, 128)                 # lane-dense slabs
    y4 = y2.astype(jnp.int32).reshape(B, s_pad // 128, 128)  # lane-dense labels
    alpha2 = jnp.broadcast_to(alpha.astype(jnp.float32).reshape(C, 1), (C, 128))

    grid = (B, s_pad // ts)
    kernel = functools.partial(_focal_kernel, gamma=float(gamma),
                               ignore_index=int(ignore_index))

    loss_part, cnt_part = pl.pallas_call(
        kernel,
        out_shape=(jax.ShapeDtypeStruct((B, 8, 128), jnp.float32),
                   jax.ShapeDtypeStruct((B, 8, 128), jnp.float32)),
        grid_spec=pltpu.PrefetchScalarGridSpec(
            num_scalar_prefetch=0,
            grid=grid,
            in_specs=[
                pl.BlockSpec((1, C, th, 128), lambda b, si: (b, 0, si, 0)),  # logits
                pl.BlockSpec((1, th, 128), lambda b, si: (b, si, 0)),        # labels
                pl.BlockSpec((C, 128), lambda b, si: (0, 0)),                # alpha (resident)
            ],
            out_specs=[
                pl.BlockSpec((1, 8, 128), lambda b, si: (b, 0, 0)),          # loss partials
                pl.BlockSpec((1, 8, 128), lambda b, si: (b, 0, 0)),          # valid-count partials
            ],
        ),
        compiler_params=pltpu.CompilerParams(
            dimension_semantics=("parallel", "arbitrary"),
            vmem_limit_bytes=48 * 1024 * 1024),
    )(x4, y4, alpha2)

    s = jnp.sum(loss_part)
    if reduction == "sum":
        return s
    c = jnp.sum(cnt_part)
    # PyTorch returns 0.0 when every label equals ignore_index.
    return jnp.where(c > 0, s / jnp.maximum(c, 1.0), jnp.float32(0.0))


def _reference_focal_loss(x, y, alpha, gamma, ignore_index):
    """Pure-JAX reference mirroring the PyTorch module (sanity check)."""
    C = x.shape[1]
    perm = (0,) + tuple(range(2, x.ndim)) + (1,)
    x2 = jnp.transpose(x, perm).reshape(-1, C).astype(jnp.float32)
    y1 = y.reshape(-1)
    valid = y1 != ignore_index
    log_p = jax.nn.log_softmax(x2, axis=-1)
    y_safe = jnp.where(valid, y1, 0)
    log_pt = jnp.take_along_axis(log_p, y_safe[:, None], axis=-1)[:, 0]
    ce = -alpha[y_safe] * log_pt
    focal = (1.0 - jnp.exp(log_pt)) ** gamma
    loss = jnp.where(valid, focal * ce, 0.0)
    cnt = jnp.sum(valid.astype(jnp.float32))
    return jnp.where(cnt > 0, jnp.sum(loss) / jnp.maximum(cnt, 1.0), 0.0)


if __name__ == "__main__":
    key = jax.random.PRNGKey(0)
    kx, ky = jax.random.split(key, 2)

    B, C, H, W = 2, 4, 16, 16
    GAMMA = 2.0
    IGNORE_INDEX = -100

    x = jax.random.normal(kx, (B, C, H, W), dtype=jnp.float32)
    y = jax.random.randint(ky, (B, H, W), 0, C, dtype=jnp.int32)
    # Sprinkle a few ignore_index labels to exercise masking.
    y = y.at[0, 0, :4].set(IGNORE_INDEX)
    # Deterministic per-class alpha weights (shape (C,), as in the module ctor).
    alpha = 0.5 + 0.1 * jnp.arange(C, dtype=jnp.float32)

    out = focal_loss(x, y, alpha, gamma=GAMMA, ignore_index=IGNORE_INDEX,
                     reduction="mean")
    out = jax.block_until_ready(out)

    ref = _reference_focal_loss(x, y, alpha, GAMMA, IGNORE_INDEX)
    assert jnp.allclose(out, ref, rtol=2e-5, atol=1e-6), (out, ref)

    print("KERNEL_OK")
</pallas_src>

<mosaic_0001>
module attributes {stable_mosaic.version = 11 : i64} {
  func.func @_focal_kernel(%arg0: i32, %arg1: i32, %arg2: memref<1x4x8x128xf32, #tpu.memory_space<vmem>>, %arg3: memref<1x8x128xi32, #tpu.memory_space<vmem>>, %arg4: memref<4x128xf32, #tpu.memory_space<vmem>>, %arg5: memref<1x8x128xf32, #tpu.memory_space<vmem>>, %arg6: memref<1x8x128xf32, #tpu.memory_space<vmem>>) attributes {dimension_semantics = [#tpu.dimension_semantics<parallel>, #tpu.dimension_semantics<arbitrary>], iteration_bounds = array<i64: 2, 1>, scalar_prefetch = 0 : i64, scratch_operands = 0 : i64, tpu.core_type = #tpu.core_type<tc>, window_params = [{transform_indices = @transform_0, window_bounds = array<i64: 1, 4, 8, 128>}, {transform_indices = @transform_1, window_bounds = array<i64: 1, 8, 128>}, {pipeline_mode = #tpu.pipeline_mode<synchronous>, transform_indices = @transform_2, window_bounds = array<i64: 4, 128>}, {transform_indices = @transform_3, window_bounds = array<i64: 1, 8, 128>}, {transform_indices = @transform_4, window_bounds = array<i64: 1, 8, 128>}]} {
    %c0_i32 = arith.constant 0 : i32
    %0 = arith.cmpi eq, %arg1, %c0_i32 : i32
    %1 = arith.extui %0 : i1 to i32
    %c0_i32_0 = arith.constant 0 : i32
    %2 = arith.cmpi ne, %1, %c0_i32_0 : i32
    scf.if %2 {
      %cst_28 = arith.constant 0.000000e+00 : f32
      %55 = vector.broadcast %cst_28 : f32 to vector<1x8x128xf32>
      %c0_29 = arith.constant 0 : index
      %c0_30 = arith.constant 0 : index
      %c0_31 = arith.constant 0 : index
      %56 = vector.load %arg5[%c0_29, %c0_30, %c0_31] : memref<1x8x128xf32, #tpu.memory_space<vmem>>, vector<1x8x128xf32>
      tpu.vector_store %arg5[%c0_29, %c0_30, %c0_31], %55 {strides = array<i32>} : memref<1x8x128xf32, #tpu.memory_space<vmem>>, vector<1x8x128xf32>,
      %cst_32 = arith.constant 0.000000e+00 : f32
      %57 = vector.broadcast %cst_32 : f32 to vector<1x8x128xf32>
      %c0_33 = arith.constant 0 : index
      %c0_34 = arith.constant 0 : index
      %c0_35 = arith.constant 0 : index
      %58 = vector.load %arg6[%c0_33, %c0_34, %c0_35] : memref<1x8x128xf32, #tpu.memory_space<vmem>>, vector<1x8x128xf32>
      tpu.vector_store %arg6[%c0_33, %c0_34, %c0_35], %57 {strides = array<i32>} : memref<1x8x128xf32, #tpu.memory_space<vmem>>, vector<1x8x128xf32>,
    } else {
    }
    %c0 = arith.constant 0 : index
    %c0_1 = arith.constant 0 : index
    %c0_2 = arith.constant 0 : index
    %c0_3 = arith.constant 0 : index
    %3 = vector.load %arg2[%c0, %c0_1, %c0_2, %c0_3] : memref<1x4x8x128xf32, #tpu.memory_space<vmem>>, vector<1x4x8x128xf32>
    %4 = vector.shape_cast %3 : vector<1x4x8x128xf32> to vector<4x8x128xf32>
    %c0_4 = arith.constant 0 : index
    %c0_5 = arith.constant 0 : index
    %c0_6 = arith.constant 0 : index
    %5 = vector.load %arg3[%c0_4, %c0_5, %c0_6] : memref<1x8x128xi32, #tpu.memory_space<vmem>>, vector<1x8x128xi32>
    %6 = vector.shape_cast %5 : vector<1x8x128xi32> to vector<8x128xi32>
    %cst = arith.constant dense<0xFF800000> : vector<8x128xf32>
    %7 = vector.multi_reduction <maximumf>, %4, %cst [0] : vector<4x8x128xf32> to vector<8x128xf32>
    %8 = vector.shape_cast %7 : vector<8x128xf32> to vector<1x8x128xf32>
    %9 = vector.broadcast %8 : vector<1x8x128xf32> to vector<4x8x128xf32>
    %10 = arith.subf %4, %9 : vector<4x8x128xf32>
    %11 = math.exp %10 : vector<4x8x128xf32>
    %cst_7 = arith.constant dense<0.000000e+00> : vector<8x128xf32>
    %12 = vector.multi_reduction <add>, %11, %cst_7 [0] : vector<4x8x128xf32> to vector<8x128xf32>
    %13 = math.log %12 : vector<8x128xf32>
    %14 = tpu.iota {dimensions = array<i32: 0>} : vector<4x128xi32>
    %15 = vector.shape_cast %14 : vector<4x128xi32> to vector<4x1x128xi32>
    %16 = vector.shape_cast %6 : vector<8x128xi32> to vector<1x8x128xi32>
    %17 = vector.broadcast %15 : vector<4x1x128xi32> to vector<4x8x128xi32>
    %18 = vector.broadcast %16 : vector<1x8x128xi32> to vector<4x8x128xi32>
    %19 = arith.cmpi eq, %17, %18 : vector<4x8x128xi32>
    %20 = arith.extui %19 : vector<4x8x128xi1> to vector<4x8x128xi32>
    %21 = arith.sitofp %20 : vector<4x8x128xi32> to vector<4x8x128xf32>
    %22 = arith.mulf %10, %21 : vector<4x8x128xf32>
    %cst_8 = arith.constant dense<0.000000e+00> : vector<8x128xf32>
    %23 = vector.multi_reduction <add>, %22, %cst_8 [0] : vector<4x8x128xf32> to vector<8x128xf32>
    %24 = arith.subf %23, %13 : vector<8x128xf32>
    %c0_9 = arith.constant 0 : index
    %c0_10 = arith.constant 0 : index
    %25 = vector.load %arg4[%c0_9, %c0_10] : memref<4x128xf32, #tpu.memory_space<vmem>>, vector<4x128xf32>
    %26 = vector.shape_cast %25 : vector<4x128xf32> to vector<4x1x128xf32>
    %27 = vector.broadcast %26 : vector<4x1x128xf32> to vector<4x8x128xf32>
    %28 = arith.mulf %27, %21 : vector<4x8x128xf32>
    %cst_11 = arith.constant dense<0.000000e+00> : vector<8x128xf32>
    %29 = vector.multi_reduction <add>, %28, %cst_11 [0] : vector<4x8x128xf32> to vector<8x128xf32>
    %cst_12 = arith.constant 0.000000e+00 : f32
    %30 = vector.broadcast %cst_12 : f32 to vector<8x128xf32>
    %31 = arith.subf %30, %29 : vector<8x128xf32>
    %32 = arith.mulf %31, %24 : vector<8x128xf32>
    %33 = math.exp %24 : vector<8x128xf32>
    %cst_13 = arith.constant 1.000000e+00 : f32
    %34 = vector.broadcast %cst_13 : f32 to vector<8x128xf32>
    %35 = arith.subf %34, %33 : vector<8x128xf32>
    %36 = arith.mulf %35, %35 : vector<8x128xf32>
    %37 = arith.mulf %36, %32 : vector<8x128xf32>
    %c-100_i32 = arith.constant -100 : i32
    %38 = vector.broadcast %c-100_i32 : i32 to vector<8x128xi32>
    %39 = arith.cmpi ne, %6, %38 : vector<8x128xi32>
    %40 = arith.extui %39 : vector<8x128xi1> to vector<8x128xi32>
    %41 = arith.sitofp %40 : vector<8x128xi32> to vector<8x128xf32>
    %42 = arith.mulf %37, %41 : vector<8x128xf32>
    %c0_14 = arith.constant 0 : index
    %c0_15 = arith.constant 0 : index
    %c0_16 = arith.constant 0 : index
    %43 = vector.load %arg5[%c0_14, %c0_15, %c0_16] : memref<1x8x128xf32, #tpu.memory_space<vmem>>, vector<1x8x128xf32>
    %44 = vector.shape_cast %42 : vector<8x128xf32> to vector<1x8x128xf32>
    %cst_17 = arith.constant dense<0.000000e+00> : vector<8x128xf32>
    %45 = vector.multi_reduction <add>, %44, %cst_17 [0] : vector<1x8x128xf32> to vector<8x128xf32>
    %46 = vector.shape_cast %45 : vector<8x128xf32> to vector<1x8x128xf32>
    %47 = arith.addf %43, %46 : vector<1x8x128xf32>
    %c0_18 = arith.constant 0 : index
    %c0_19 = arith.constant 0 : index
    %c0_20 = arith.constant 0 : index
    %48 = vector.load %arg5[%c0_18, %c0_19, %c0_20] : memref<1x8x128xf32, #tpu.memory_space<vmem>>, vector<1x8x128xf32>
    tpu.vector_store %arg5[%c0_18, %c0_19, %c0_20], %47 {strides = array<i32>} : memref<1x8x128xf32, #tpu.memory_space<vmem>>, vector<1x8x128xf32>,
    %c0_21 = arith.constant 0 : index
    %c0_22 = arith.constant 0 : index
    %c0_23 = arith.constant 0 : index
    %49 = vector.load %arg6[%c0_21, %c0_22, %c0_23] : memref<1x8x128xf32, #tpu.memory_space<vmem>>, vector<1x8x128xf32>
    %50 = vector.shape_cast %41 : vector<8x128xf32> to vector<1x8x128xf32>
    %cst_24 = arith.constant dense<0.000000e+00> : vector<8x128xf32>
    %51 = vector.multi_reduction <add>, %50, %cst_24 [0] : vector<1x8x128xf32> to vector<8x128xf32>
    %52 = vector.shape_cast %51 : vector<8x128xf32> to vector<1x8x128xf32>
    %53 = arith.addf %49, %52 : vector<1x8x128xf32>
    %c0_25 = arith.constant 0 : index
    %c0_26 = arith.constant 0 : index
    %c0_27 = arith.constant 0 : index
    %54 = vector.load %arg6[%c0_25, %c0_26, %c0_27] : memref<1x8x128xf32, #tpu.memory_space<vmem>>, vector<1x8x128xf32>
    tpu.vector_store %arg6[%c0_25, %c0_26, %c0_27], %53 {strides = array<i32>} : memref<1x8x128xf32, #tpu.memory_space<vmem>>, vector<1x8x128xf32>,
    return
  }
  func.func @transform_0(%arg0: i32, %arg1: i32) -> (i32, i32, i32, i32) {
    %c0_i32 = arith.constant 0 : i32
    %c0_i32_0 = arith.constant 0 : i32
    %c0_i32_1 = arith.constant 0 : i32
    return %arg0, %c0_i32, %arg1, %c0_i32_0 : i32, i32, i32, i32
  }
  func.func @transform_1(%arg0: i32, %arg1: i32) -> (i32, i32, i32) {
    %c0_i32 = arith.constant 0 : i32
    %c0_i32_0 = arith.constant 0 : i32
    return %arg0, %arg1, %c0_i32 : i32, i32, i32
  }
  func.func @transform_2(%arg0: i32, %arg1: i32) -> (i32, i32) {
    %c0_i32 = arith.constant 0 : i32
    %c0_i32_0 = arith.constant 0 : i32
    %c0_i32_1 = arith.constant 0 : i32
    return %c0_i32, %c0_i32_0 : i32, i32
  }
  func.func @transform_3(%arg0: i32, %arg1: i32) -> (i32, i32, i32) {
    %c0_i32 = arith.constant 0 : i32
    %c0_i32_0 = arith.constant 0 : i32
    %c0_i32_1 = arith.constant 0 : i32
    return %arg0, %c0_i32, %c0_i32_0 : i32, i32, i32
  }
  func.func @transform_4(%arg0: i32, %arg1: i32) -> (i32, i32, i32) {
    %c0_i32 = arith.constant 0 : i32
    %c0_i32_0 = arith.constant 0 : i32
    %c0_i32_1 = arith.constant 0 : i32
    return %arg0, %c0_i32, %c0_i32_0 : i32, i32, i32
  }
}

</mosaic_0001>

<llo_original>
// kernel: tpu_custom_call.1
$region0: #{tpu_custom_call.1}
  #allocation0 [shape = 'u32[]', space=smem, size = 0x4, offset = 0x4, fixed_abs, tag = 'smem constant byte address 0x4 - core index']
  #allocation1 [shape = 'u32[144,128]{1,0:T(1,128)}', space=vmem, size = 0x12000, scoped, tag = 'internal scratch']
  %s0 = inlined_call_operand.hbm [shape: f32[2,4,8,128], index: 0, kind: input, shape index: {}]
  %s1 = inlined_call_operand.hbm [shape: s32[2,8,128], index: 1, kind: input, shape index: {}]
  %s2 = inlined_call_operand.hbm [shape: f32[4,128], index: 2, kind: input, shape index: {}]
  %s3 = inlined_call_operand.hbm [shape: f32[2,8,128], index: 3, kind: output, shape index: {0}]
  %s4 = inlined_call_operand.hbm [shape: f32[2,8,128], index: 4, kind: output, shape index: {1}]
  %5 = xla_tuple %s3, %s4
  %s6 = sld [smem:[#allocation0]]
  $region69: #{tpu_custom_call.1} parent=0
    _
  %s8 = ssub.s32 1, %s6
  %s9 = scalar_select 0, %s8, %s6
  $region1: #{tpu_custom_call.1} parent=0
    #allocation2 [shape = 'u8[32768]{0}', space=vmem, size = 0x8000, scoped, tag = 'input window, operand 0']
    #allocation3 [shape = 's32[2]{0}', space=sflag, size = 0x8, scoped, tag = 'scoped memory for tpu_custom_call.1']
    #allocation4 [shape = 's32[2]{0}', space=sflag, size = 0x8, scoped, tag = 'scoped memory for tpu_custom_call.1']
    #allocation5 [shape = 'u8[8192]{0}', space=vmem, size = 0x2000, scoped, tag = 'input window, operand 1']
    #allocation6 [shape = 's32[2]{0}', space=sflag, size = 0x8, scoped, tag = 'scoped memory for tpu_custom_call.1']
    #allocation7 [shape = 'u8[2048]{0}', space=vmem, size = 0x800, scoped, tag = 'input window, operand 2, single buffered']
    #allocation8 [shape = 'u8[8192]{0}', space=vmem, size = 0x2000, scoped, tag = 'output window, operand 0']
    #allocation9 [shape = 'u8[8192]{0}', space=vmem, size = 0x2000, scoped, tag = 'output window, operand 1']
    #allocation10 [shape = 's32[2]{0}', space=sflag, size = 0x8, scoped, tag = 'scoped memory for tpu_custom_call.1']
    %10 = vsyncpa [#allocation3], 0
    %s11 = scalar_lea.sflag [#allocation3], 1
    %12 = vsyncpa %s11, 0
    %13 = vsyncpa [#allocation6], 0
    %s14 = scalar_lea.sflag [#allocation6], 1
    %15 = vsyncpa %s14, 0
    %16 = vsyncpa [#allocation4], 0
    %s17 = scalar_lea.sflag [#allocation4], 1
    %18 = vsyncpa %s17, 0
    %19 = vsyncpa [#allocation10], 0
    %s20 = scalar_lea.sflag [#allocation10], 1
    %21 = vsyncpa %s20, 0
    loop: start=0, step=1, limit=4
    $region2: #{tpu_custom_call.1} parent=1 // loop_pre_header
      _
    $region3: #{tpu_custom_call.1} parent=1 // loop_header
      %s23 = sphi 0, %s27
      %p24 = scmp.ge.s32.totalorder %s23, 4
      %s30 = sphi 0, %s42
      %s31 = sphi 0, %s38
      %s32 = sphi 0, %s30
      %s33 = sphi 0, %s31
      %s34 = sphi 0, %s32
      %s35 = sphi 0, %s33
      %s47 = sphi 0, %s49
      %s50 = sphi 0, %s47
      %s51 = sphi 0, %s50
      %s67 = sphi 0, %s51
      %s75 = sphi 0, %s77
      %s78 = sphi 0, %s75
      %s79 = sphi 0, %s78
      %s95 = sphi 0, %s79
      %s99 = sphi 0, %s99
      %s101 = sphi 0, %s99
      %s102 = sphi 0, %s101
      %s116 = sphi 0, %s102
      %s122 = sphi 0, %s124
      %s125 = sphi 0, %s122
      %s126 = sphi 0, %s125
      %s142 = sphi 0, %s126
      %s148 = sphi 0, %s150
      %s151 = sphi 0, %s148
      %s152 = sphi 0, %s151
      %s168 = sphi 0, %s152
    $region4: #{tpu_custom_call.1} parent=1 // loop_header_branch
      %26 = sbr.rel (%p24) target = $region8
    $region5: #{tpu_custom_call.1} parent=1 // loop_body
      %s28 = ssub.s32 %s23, 1
      %s29 = ssub.s32 %s23, 2
      %s36 = sadd.s32 1, %s31
      %p37 = scmp.ge.s32.totalorder %s36, 1
      %s38 = scalar_select %p37, 0, %s36
      %s39 = sadd.s32 1, %s30
      %s40 = scalar_select %p37, %s39, %s30
      %p41 = scmp.ge.s32.totalorder %s40, 2
      %s42 = scalar_select %p41, 0, %s40
      %s43 = ssub.s32 %s30, %s42
      %s44 = ssub.s32 %s31, %s38
      %s45 = sor.u32 %s43, %s44
      %p46 = scmp.eq.s32.totalorder %s45, 0
      %s48 = sadd.s32 %s47, 1
      %s49 = scalar_select %p46, %s47, %s48
      %p52 = pneg %p46
      %p53 = scmp.eq.s32.totalorder %s23, 1
      %p54 = por %p52, %p53
      %p55 = scmp.ne.s32.totalorder %s47, %s50
      %p56 = scmp.eq.s32.totalorder %s23, 0
      %p57 = por %p55, %p56
      %p58 = scmp.ne.s32.totalorder %s47, %s50
      %p59 = scmp.eq.s32.totalorder %s28, 1
      %p60 = por %p58, %p59
      %p61 = scmp.ne.s32.totalorder %s50, %s51
      %p62 = scmp.eq.s32.totalorder %s28, 0
      %p63 = por %p61, %p62
      %p64 = scmp.ne.s32.totalorder %s50, %s51
      %p65 = scmp.eq.s32.totalorder %s29, 1
      %p66 = por %p64, %p65
      %p68 = scmp.ne.s32.totalorder %s51, %s67
      %p69 = scmp.eq.s32.totalorder %s29, 0
      %p70 = por %p68, %p69
      %s71 = ssub.s32 %s30, %s42
      %s72 = ssub.s32 %s31, %s38
      %s73 = sor.u32 %s71, %s72
      %p74 = scmp.eq.s32.totalorder %s73, 0
      %s76 = sadd.s32 %s75, 1
      %s77 = scalar_select %p74, %s75, %s76
      %p80 = pneg %p74
      %p81 = scmp.eq.s32.totalorder %s23, 1
      %p82 = por %p80, %p81
      %p83 = scmp.ne.s32.totalorder %s75, %s78
      %p84 = scmp.eq.s32.totalorder %s23, 0
      %p85 = por %p83, %p84
      %p86 = scmp.ne.s32.totalorder %s75, %s78
      %p87 = scmp.eq.s32.totalorder %s28, 1
      %p88 = por %p86, %p87
      %p89 = scmp.ne.s32.totalorder %s78, %s79
      %p90 = scmp.eq.s32.totalorder %s28, 0
      %p91 = por %p89, %p90
      %p92 = scmp.ne.s32.totalorder %s78, %s79
      %p93 = scmp.eq.s32.totalorder %s29, 1
      %p94 = por %p92, %p93
      %p96 = scmp.ne.s32.totalorder %s79, %s95
      %p97 = scmp.eq.s32.totalorder %s29, 0
      %p98 = por %p96, %p97
      %s100 = sadd.s32 %s99, 1
      %p103 = scmp.eq.s32.totalorder %s23, 1
      %p104 = scmp.ne.s32.totalorder %s99, %s101
      %p105 = scmp.eq.s32.totalorder %s23, 0
      %p106 = por %p104, %p105
      %p107 = scmp.ne.s32.totalorder %s99, %s101
      %p108 = scmp.eq.s32.totalorder %s28, 1
      %p109 = por %p107, %p108
      %p110 = scmp.ne.s32.totalorder %s101, %s102
      %p111 = scmp.eq.s32.totalorder %s28, 0
      %p112 = por %p110, %p111
      %p113 = scmp.ne.s32.totalorder %s101, %s102
      %p114 = scmp.eq.s32.totalorder %s29, 1
      %p115 = por %p113, %p114
      %p117 = scmp.ne.s32.totalorder %s102, %s116
      %p118 = scmp.eq.s32.totalorder %s29, 0
      %p119 = por %p117, %p118
      %s120 = ssub.s32 %s30, %s42
      %p121 = scmp.eq.s32.totalorder %s120, 0
      %s123 = sadd.s32 %s122, 1
      %s124 = scalar_select %p121, %s122, %s123
      %p127 = pneg %p121
      %p128 = scmp.eq.s32.totalorder %s23, 1
      %p129 = por %p127, %p128
      %p130 = scmp.ne.s32.totalorder %s122, %s125
      %p131 = scmp.eq.s32.totalorder %s23, 0
      %p132 = por %p130, %p131
      %p133 = scmp.ne.s32.totalorder %s122, %s125
      %p134 = scmp.eq.s32.totalorder %s28, 1
      %p135 = por %p133, %p134
      %p136 = scmp.ne.s32.totalorder %s125, %s126
      %p137 = scmp.eq.s32.totalorder %s28, 0
      %p138 = por %p136, %p137
      %p139 = scmp.ne.s32.totalorder %s125, %s126
      %p140 = scmp.eq.s32.totalorder %s29, 1
      %p141 = por %p139, %p140
      %p143 = scmp.ne.s32.totalorder %s126, %s142
      %p144 = scmp.eq.s32.totalorder %s29, 0
      %p145 = por %p143, %p144
      %s146 = ssub.s32 %s30, %s42
      %p147 = scmp.eq.s32.totalorder %s146, 0
      %s149 = sadd.s32 %s148, 1
      %s150 = scalar_select %p147, %s148, %s149
      %p153 = pneg %p147
      %p154 = scmp.eq.s32.totalorder %s23, 1
      %p155 = por %p153, %p154
      %p156 = scmp.ne.s32.totalorder %s148, %s151
      %p157 = scmp.eq.s32.totalorder %s23, 0
      %p158 = por %p156, %p157
      %p159 = scmp.ne.s32.totalorder %s148, %s151
      %p160 = scmp.eq.s32.totalorder %s28, 1
      %p161 = por %p159, %p160
      %p162 = scmp.ne.s32.totalorder %s151, %s152
      %p163 = scmp.eq.s32.totalorder %s28, 0
      %p164 = por %p162, %p163
      %p165 = scmp.ne.s32.totalorder %s151, %s152
      %p166 = scmp.eq.s32.totalorder %s29, 1
      %p167 = por %p165, %p166
      %p169 = scmp.ne.s32.totalorder %s152, %s168
      %p170 = scmp.eq.s32.totalorder %s29, 0
      %p171 = por %p169, %p170
      %p172 = scmp.le.s32.totalorder 1, %s23
      %p173 = scmp.lt.s32.totalorder %s23, 3
      %p174 = pnand %p172, %p173
      %p175 = pneg %p174
      // Predicated region
      $region9: #{tpu_custom_call.1} parent=5 // pred_check
        _
      $region10: #{tpu_custom_call.1} parent=5 // pred_check_branch
        %177 = sbr.rel (%p174) target = $region12
      $region11: #{tpu_custom_call.1} parent=5 // pred_region
        %s178 = ssub.s32 %s23, 1
        // Predicated region
        $region13: #{tpu_custom_call.1} parent=11 // pred_check
          %p179 = pneg %p112
        $region14: #{tpu_custom_call.1} parent=11 // pred_check_branch
          %181 = sbr.rel (%p179) target = $region16
        $region15: #{tpu_custom_call.1} parent=11 // pred_region
          %s183 = ssub.s32 64, 64
          %184 = vsyncadd [#allocation6], %s183
          %s186 = sshll.u32 [#allocation7], 4
          %s187 = int_to_ptr.vmem [resolvable:$true] %s186
          %189 = dma.hbm_to_vmem [thread:$0]  %s2, 64, %s187, [#allocation6]
        $region16: #{tpu_custom_call.1} parent=11 // pred_fallthru
          _
      $region12: #{tpu_custom_call.1} parent=5 // pred_fallthru
        _
      %p190 = scmp.lt.s32.totalorder %s23, 2
      // Predicated region
      $region17: #{tpu_custom_call.1} parent=5 // pred_check
        %p191 = pneg %p190
      $region18: #{tpu_custom_call.1} parent=5 // pred_check_branch
        %193 = sbr.rel (%p191) target = $region20
      $region19: #{tpu_custom_call.1} parent=5 // pred_region
        // Predicated region
        $region21: #{tpu_custom_call.1} parent=19 // pred_check
          %p194 = pneg %p57
        $region22: #{tpu_custom_call.1} parent=19 // pred_check_branch
          %196 = sbr.rel (%p194) target = $region24
        $region23: #{tpu_custom_call.1} parent=19 // pred_region
          %s197 = sand.u32 %s47, 1
          %s198 = scalar_lea.sflag [#allocation3], %s197
          %s199 = sand.u32 %s47, 1
          %s200 = smul.addr %s199, 32
          %s201 = scalar_lea.vmem [#allocation2], %s200
          %s203 = ssub.s32 512, 512
          %204 = vsyncadd %s198, %s203
          %s205 = smul.addr %s30, 4
          %s206 = sadd.s32 %s31, %s205
          %s207 = smul.addr %s206, 128
          %s208 = scalar_lea.hbm %s0, %s207
          %s209 = sshll.u32 %s201, 4
          %s210 = int_to_ptr.vmem [resolvable:$true] %s209
          %215 = dma.hbm_to_vmem [thread:$0]  %s208, 512, %s210, %s198, 128, 128, 8
        $region24: #{tpu_custom_call.1} parent=19 // pred_fallthru
          _
        // Predicated region
        $region25: #{tpu_custom_call.1} parent=19 // pred_check
          %p216 = pneg %p85
        $region26: #{tpu_custom_call.1} parent=19 // pred_check_branch
          %218 = sbr.rel (%p216) target = $region28
        $region27: #{tpu_custom_call.1} parent=19 // pred_region
          %s219 = sand.u32 %s23, 1
          %s220 = scalar_lea.sflag [#allocation6], %s219
          %s221 = sand.u32 %s75, 1
          %s222 = smul.addr %s221, 8
          %s223 = scalar_lea.vmem [#allocation5], %s222
          %s225 = ssub.s32 128, 128
          %226 = vsyncadd %s220, %s225
          %s227 = sadd.s32 %s31, %s30
          %s228 = smul.addr %s227, 128
          %s229 = scalar_lea.hbm %s1, %s228
          %s231 = sshll.u32 %s223, 4
          %s232 = int_to_ptr.vmem [resolvable:$true] %s231
          %234 = dma.hbm_to_vmem [thread:$0]  %s229, 128, %s232, %s220
        $region28: #{tpu_custom_call.1} parent=19 // pred_fallthru
          _
      $region20: #{tpu_custom_call.1} parent=5 // pred_fallthru
        _
      %p235 = scmp.le.s32.totalorder 1, %s23
      %p236 = scmp.lt.s32.totalorder %s23, 3
      %p237 = pnand %p235, %p236
      %p238 = pneg %p237
      // Predicated region
      $region29: #{tpu_custom_call.1} parent=5 // pred_check
        _
      $region30: #{tpu_custom_call.1} parent=5 // pred_check_branch
        %240 = sbr.rel (%p237) target = $region32
      $region31: #{tpu_custom_call.1} parent=5 // pred_region
        %s241 = ssub.s32 %s23, 1
        %s242 = sand.u32 %s50, 1
        %s243 = scalar_lea.sflag [#allocation3], %s242
        %s244 = sand.u32 %s50, 1
        %s245 = smul.addr %s244, 32
        %s246 = scalar_lea.vmem [#allocation2], %s245
        // Predicated region
        $region33: #{tpu_custom_call.1} parent=31 // pred_check
          %p247 = pneg %p63
        $region34: #{tpu_custom_call.1} parent=31 // pred_check_branch
          %249 = sbr.rel (%p247) target = $region36
        $region35: #{tpu_custom_call.1} parent=31 // pred_region
          %250 = dma.done %s243, 512
        $region36: #{tpu_custom_call.1} parent=31 // pred_fallthru
          _
        %s251 = sand.u32 %s28, 1
        %s252 = scalar_lea.sflag [#allocation6], %s251
        %s253 = sand.u32 %s78, 1
        %s254 = smul.addr %s253, 8
        %s255 = scalar_lea.vmem [#allocation5], %s254
        // Predicated region
        $region37: #{tpu_custom_call.1} parent=31 // pred_check
          %p256 = pneg %p91
        $region38: #{tpu_custom_call.1} parent=31 // pred_check_branch
          %258 = sbr.rel (%p256) target = $region40
        $region39: #{tpu_custom_call.1} parent=31 // pred_region
          %259 = dma.done %s252, 128
        $region40: #{tpu_custom_call.1} parent=31 // pred_fallthru
          _
        // Predicated region
        $region41: #{tpu_custom_call.1} parent=31 // pred_check
          %p260 = pneg %p112
        $region42: #{tpu_custom_call.1} parent=31 // pred_check_branch
          %262 = sbr.rel (%p260) target = $region44
        $region43: #{tpu_custom_call.1} parent=31 // pred_region
          %263 = dma.done [#allocation6], 64
        $region44: #{tpu_custom_call.1} parent=31 // pred_fallthru
          _
        %s264 = sand.u32 %s50, 1
        %s265 = scalar_lea.sflag [#allocation3], %s264
        %s266 = sand.u32 %s50, 1
        %s267 = smul.addr %s266, 32
        %s268 = scalar_lea.vmem [#allocation2], %s267
        %p269 = pneg %p63
        %p270 = pneg %p60
        %s271 = sand.u32 %s28, 1
        %s272 = scalar_lea.sflag [#allocation6], %s271
        %s273 = sand.u32 %s78, 1
        %s274 = smul.addr %s273, 8
        %s275 = scalar_lea.vmem [#allocation5], %s274
        %p276 = pneg %p91
        %p277 = pneg %p88
        %p278 = pneg %p112
        %p279 = pneg %p109
        %p280 = pneg %p138
        %p281 = pneg %p135
        %s282 = sand.u32 %s125, 1
        %s283 = scalar_lea.sflag [#allocation4], %s282
        %s284 = sand.u32 %s125, 1
        %s285 = smul.addr %s284, 8
        %s286 = scalar_lea.vmem [#allocation8], %s285
        %p287 = pneg %p164
        %p288 = pneg %p161
        %s289 = sand.u32 %s151, 1
        %s290 = scalar_lea.sflag [#allocation10], %s289
        %s291 = sand.u32 %s151, 1
        %s292 = smul.addr %s291, 8
        %s293 = scalar_lea.vmem [#allocation9], %s292
        %p294 = scmp.eq.s32.totalorder %s33, 0
        // Predicated region
        $region45: #{tpu_custom_call.1} parent=31 // pred_check
          %p295 = pneg %p294
        $region46: #{tpu_custom_call.1} parent=31 // pred_check_branch
          %297 = sbr.rel (%p295) target = $region48
        $region47: #{tpu_custom_call.1} parent=31 // pred_region
          %298 = vst [vmem:[%s286] sm:$0xff] 0.0
          %299 = vst [vmem:[%s293] sm:$0xff] 0.0
        $region48: #{tpu_custom_call.1} parent=31 // pred_fallthru
          _
        %v300 = vld [vmem:[%s246] sm:$0xff]
        %v301 = vld [vmem:[%s246 + $0x8] sm:$0xff]
        %v302 = vld [vmem:[%s246 + $0x10] sm:$0xff]
        %v303 = vld [vmem:[%s246 + $0x18] sm:$0xff]
        %v304 = vld [vmem:[%s255] sm:$0xff]
        %v305 = vmax.f32 %v300, %v301
        %v306 = vmax.f32 %v302, %v303
        %v307 = vmax.f32 %v305, %v306
        %v308 = vsub.f32 %v300, %v307
        %v309 = vsub.f32 %v301, %v307
        %v310 = vsub.f32 %v302, %v307
        %v311 = vsub.f32 %v303, %v307
        %v312 = vmul.f32 %v308, 1.442695
        %v313 = vpow.pop %v312
        %v314 = vmul.f32 %v309, 1.442695
        %v315 = vpow.pop %v314
        %v316 = vmul.f32 %v310, 1.442695
        %v317 = vpow.pop %v316
        %v318 = vmul.f32 %v311, 1.442695
        %v319 = vpow.pop %v318
        %v320 = vadd.f32 %v313, %v315
        %v321 = vadd.f32 %v320, %v317
        %v322 = vadd.f32 %v321, %v319
        %v323 = vlog2.pop %v322
        %v324 = vmul.f32 %v323, 0.6931472
        %v325 = vlaneseq
        %v326 = vshrl.u32 %v325, 7
        %v327 = vlaneseq
        %v328 = vshrl.u32 %v327, 7
        %v329 = vsub.s32 0, %v328
        %v330 = vrot.slane %v326, %v329
        %v331 = vlaneseq
        %v332 = vshrl.u32 %v331, 7
        %v333 = vsub.s32 1, %v332
        %v334 = vrot.slane %v326, %v333
        %v335 = vlaneseq
        %v336 = vshrl.u32 %v335, 7
        %v337 = vsub.s32 2, %v336
        %v338 = vrot.slane %v326, %v337
        %v339 = vlaneseq
        %v340 = vshrl.u32 %v339, 7
        %v341 = vsub.s32 3, %v340
        %v342 = vrot.slane %v326, %v341
        %vm343 = vcmp.eq.s32.totalorder %v330, %v304
        %vm344 = vcmp.eq.s32.totalorder %v334, %v304
        %vm345 = vcmp.eq.s32.totalorder %v338, %v304
        %vm346 = vcmp.eq.s32.totalorder %v342, %v304
        %v347 = vsel %vm343, 1, 0
        %v348 = vsel %vm344, 1, 0
        %v349 = vsel %vm345, 1, 0
        %v350 = vsel %vm346, 1, 0
        %v351 = vcvt.s32.f32 %v347
        %v352 = vcvt.s32.f32 %v348
        %v353 = vcvt.s32.f32 %v349
        %v354 = vcvt.s32.f32 %v350
        %v355 = vmul.f32 %v308, %v351
        %v356 = vmul.f32 %v309, %v352
        %v357 = vmul.f32 %v310, %v353
        %v358 = vmul.f32 %v311, %v354
        %v359 = vadd.f32 %v355, %v356
        %v360 = vadd.f32 %v359, %v357
        %v361 = vadd.f32 %v360, %v358
        %v362 = vsub.f32 %v361, %v324
        %v363 = vld [vmem:[#allocation7] sm:$0xf]
        %v366 = vunpack.c.l.s4 1966171168
        %v367 = vunpack.c.0.s8 %v366
        %v368 = vlaneseq
        %v369 = vshrl.u32 %v368, 7
        %v370 = vsub.s32 %v367, %v369
        %v371 = vrot.slane %v363, %v370
        %v372 = vcombine.high %v371, %v371
        %v374 = vunpack.c.l.s4 1966171168
        %v375 = vunpack.c.0.s8 %v374
        %v376 = vlaneseq
        %v377 = vshrl.u32 %v376, 7
        %v378 = vsub.s32 %v375, %v377
        %v379 = vrot.slane %v371, %v378
        %v381 = vunpack.c.l.s4 1966171168
        %v382 = vunpack.c.0.s8 %v381
        %v383 = vlaneseq
        %v384 = vshrl.u32 %v383, 7
        %v385 = vsub.s32 %v382, %v384
        %v386 = vrot.slane %v372, %v385
        %v387 = vcombine.high %v379, %v379
        %v388 = vcombine.high %v386, %v386
        %v389 = vlaneseq
        %v390 = vshrl.u32 %v389, 7
        %v391 = vsub.s32 0, %v390
        %v392 = vrot.slane %v379, %v391
        %v393 = vlaneseq
        %v394 = vshrl.u32 %v393, 7
        %v395 = vsub.s32 0, %v394
        %v396 = vrot.slane %v386, %v395
        %v397 = vlaneseq
        %v398 = vshrl.u32 %v397, 7
        %v399 = vsub.s32 0, %v398
        %v400 = vrot.slane %v387, %v399
        %v401 = vlaneseq
        %v402 = vshrl.u32 %v401, 7
        %v403 = vsub.s32 0, %v402
        %v404 = vrot.slane %v388, %v403
        %v409 = vmul.f32 %v392, %v351
        %v410 = vmul.f32 %v396, %v352
        %v411 = vmul.f32 %v400, %v353
        %v412 = vmul.f32 %v404, %v354
        %v413 = vadd.f32 %v409, %v410
        %v414 = vadd.f32 %v413, %v411
        %v415 = vadd.f32 %v414, %v412
        %v416 = vsub.f32 0.0, %v415
        %v417 = vmul.f32 %v416, %v362
        %v418 = vmul.f32 %v362, 1.442695
        %v419 = vpow.pop %v418
        %v420 = vsub.f32 1.0, %v419
        %v421 = vmul.f32 %v420, %v420
        %v422 = vmul.f32 %v421, %v417
        %vm423 = vcmp.ne.s32.totalorder %v304, 4294967196
        %v424 = vsel %vm423, 1, 0
        %v425 = vcvt.s32.f32 %v424
        %v426 = vmul.f32 %v422, %v425
        %v427 = vld [vmem:[%s286] sm:$0xff]
        %v428 = vadd.f32 %v426, 0.0
        %v429 = vadd.f32 %v427, %v428
        %430 = vst [vmem:[%s286] sm:$0xff] %v429
        %v431 = vld [vmem:[%s293] sm:$0xff]
        %v432 = vadd.f32 %v425, 0.0
        %v433 = vadd.f32 %v431, %v432
        %434 = vst [vmem:[%s293] sm:$0xff] %v433
        %s435 = sand.u32 %s125, 1
        %s436 = scalar_lea.sflag [#allocation4], %s435
        %s437 = sand.u32 %s125, 1
        %s438 = smul.addr %s437, 8
        %s439 = scalar_lea.vmem [#allocation8], %s438
        %s440 = sand.u32 %s151, 1
        %s441 = scalar_lea.sflag [#allocation10], %s440
        %s442 = sand.u32 %s151, 1
        %s443 = smul.addr %s442, 8
        %s444 = scalar_lea.vmem [#allocation9], %s443
        // Predicated region
        $region49: #{tpu_custom_call.1} parent=31 // pred_check
          %p445 = pneg %p135
        $region50: #{tpu_custom_call.1} parent=31 // pred_check_branch
          %447 = sbr.rel (%p445) target = $region52
        $region51: #{tpu_custom_call.1} parent=31 // pred_region
          %s449 = ssub.s32 128, 128
          %450 = vsyncadd %s436, %s449
          %s451 = smul.addr %s32, 128
          %s452 = scalar_lea.hbm %s3, %s451
          %s454 = sshll.u32 %s439, 4
          %s455 = int_to_ptr.vmem [resolvable:$true] %s454
          %457 = dma.vmem_to_hbm [thread:$0]  %s455, 128, %s452, %s436
        $region52: #{tpu_custom_call.1} parent=31 // pred_fallthru
          _
        // Predicated region
        $region53: #{tpu_custom_call.1} parent=31 // pred_check
          %p458 = pneg %p161
        $region54: #{tpu_custom_call.1} parent=31 // pred_check_branch
          %460 = sbr.rel (%p458) target = $region56
        $region55: #{tpu_custom_call.1} parent=31 // pred_region
          %s462 = ssub.s32 128, 128
          %463 = vsyncadd %s441, %s462
          %s464 = smul.addr %s32, 128
          %s465 = scalar_lea.hbm %s4, %s464
          %s467 = sshll.u32 %s444, 4
          %s468 = int_to_ptr.vmem [resolvable:$true] %s467
          %470 = dma.vmem_to_hbm [thread:$0]  %s468, 128, %s465, %s441
        $region56: #{tpu_custom_call.1} parent=31 // pred_fallthru
          _
      $region32: #{tpu_custom_call.1} parent=5 // pred_fallthru
        _
      %p471 = scmp.le.s32.totalorder 2, %s23
      // Predicated region
      $region57: #{tpu_custom_call.1} parent=5 // pred_check
        %p472 = pneg %p471
      $region58: #{tpu_custom_call.1} parent=5 // pred_check_branch
        %474 = sbr.rel (%p472) target = $region60
      $region59: #{tpu_custom_call.1} parent=5 // pred_region
        %s475 = ssub.s32 %s23, 2
        // Predicated region
        $region61: #{tpu_custom_call.1} parent=59 // pred_check
          %p476 = pneg %p141
        $region62: #{tpu_custom_call.1} parent=59 // pred_check_branch
          %478 = sbr.rel (%p476) target = $region64
        $region63: #{tpu_custom_call.1} parent=59 // pred_region
          %s479 = sand.u32 %s126, 1
          %s480 = scalar_lea.sflag [#allocation4], %s479
          %s481 = sand.u32 %s126, 1
          %s482 = smul.addr %s481, 8
          %s483 = scalar_lea.vmem [#allocation8], %s482
          %484 = dma.done %s480, 128
        $region64: #{tpu_custom_call.1} parent=59 // pred_fallthru
          _
        // Predicated region
        $region65: #{tpu_custom_call.1} parent=59 // pred_check
          %p485 = pneg %p167
        $region66: #{tpu_custom_call.1} parent=59 // pred_check_branch
          %487 = sbr.rel (%p485) target = $region68
        $region67: #{tpu_custom_call.1} parent=59 // pred_region
          %s488 = sand.u32 %s152, 1
          %s489 = scalar_lea.sflag [#allocation10], %s488
          %s490 = sand.u32 %s152, 1
          %s491 = smul.addr %s490, 8
          %s492 = scalar_lea.vmem [#allocation9], %s491
          %493 = dma.done %s489, 128
        $region68: #{tpu_custom_call.1} parent=59 // pred_fallthru
          _
      $region60: #{tpu_custom_call.1} parent=5 // pred_fallthru
        _
    $region6: #{tpu_custom_call.1} parent=1 // loop_footer
      %s27 = sadd.s32 1, %s23
    $region7: #{tpu_custom_call.1} parent=1 // loop_footer_branch
      %22 = sbr.rel target = $region3
    $region8: #{tpu_custom_call.1} parent=1 // loop_exit
      _
    %494 = vsyncpa [#allocation3], 1
    %s495 = scalar_lea.sflag [#allocation3], 1
    %496 = vsyncpa %s495, 1
    %497 = vsyncpa [#allocation6], 1
    %s498 = scalar_lea.sflag [#allocation6], 1
    %499 = vsyncpa %s498, 1
    %500 = vsyncpa [#allocation4], 1
    %s501 = scalar_lea.sflag [#allocation4], 1
    %502 = vsyncpa %s501, 1
    %503 = vsyncpa [#allocation10], 1
    %s504 = scalar_lea.sflag [#allocation10], 1
    %505 = vsyncpa %s504, 1

</llo_original>
